<compile_context>
chip_gen: v7x
topology: tpu7x:2x2x1
jax: 0.10.0
libtpu: 0.0.40
codegen_flags: <defaults>
</compile_context>

<pallas_src>
import jax
import jax.numpy as jnp
import numpy as np
from jax.experimental import pallas as pl
from jax.experimental.pallas import tpu as pltpu

# ----------------------------- configuration --------------------------------
# Module hyper-parameters (mirrors DiscriminatorZ(KS, ST, DP, LS, nc)):
KS = [1, 1, 1]          # kernel sizes (1x1 convs on the 1x1 latent map)
ST = [1, 1, 1]          # strides
DP = [64, 64, 1]        # out_channels per layer
LS = 32                 # latent size (in_channels of the first conv)
NC = 3                  # unused by the module (kept for signature parity)
LEAK = 0.1

LANE = 128              # lane width
SUBLANE = 8             # sublane width (f32)
BATCH = 2


# ------------------------------- Pallas kernel -------------------------------
def _disc_z_kernel(x_ref, w0_ref, w1_ref, w2_ref, o_ref):
    """Fused  W2p @ leaky(W1 @ leaky(W0 @ X))  in channels-major layout.

    x_ref : (LS, btile)   latent codes, batch on lanes
    w0_ref: (64, LS)      Conv_0 weight
    w1_ref: (64, 64)      Conv_1 weight
    w2_ref: (8, 64)       Conv_2 weight, zero-padded from (1, 64) rows
    o_ref : (8, btile)    row 0 is the real logit, rows 1..7 are zeros
    """
    x = x_ref[...]

    # Layer 0: Conv_0 (1x1, no bias) + LeakyReLU(0.1)   [Dropout == identity in eval]
    h = jnp.dot(w0_ref[...], x, preferred_element_type=jnp.float32)
    h = jnp.maximum(h, LEAK * h)

    # Layer 1: Conv_1 (1x1, no bias) + LeakyReLU(0.1)
    h = jnp.dot(w1_ref[...], h, preferred_element_type=jnp.float32)
    h = jnp.maximum(h, LEAK * h)

    # Layer 2: Conv_2 (1x1, no bias) — last layer, no activation / dropout.
    h = jnp.dot(w2_ref[...], h, preferred_element_type=jnp.float32)

    o_ref[...] = h.astype(o_ref.dtype)


def _round_up(n, m):
    return -(-n // m) * m


def discriminator_z_forward(x_nchw, weights, *, lane_tile=1024):
    """x_nchw: (B, LS, 1, 1) float32.  weights: list of conv weights (Cout, Cin, 1, 1)."""
    B, c_in = x_nchw.shape[0], x_nchw.shape[1]
    c_out = weights[-1].shape[0]                       # = DP[-1] = 1

    # Glue (layout plumbing): flatten NCHW -> (B, C) and put the batch on the
    # lane axis: X = z^T of shape (C, B).  Weights stay (Cout, Cin) — no
    # transpose needed in this layout.
    x = x_nchw.reshape(B, c_in).T                      # (LS, B)
    w0 = weights[0].reshape(weights[0].shape[0], weights[0].shape[1])   # (64, 32)
    w1 = weights[1].reshape(weights[1].shape[0], weights[1].shape[1])   # (64, 64)
    w2 = weights[2].reshape(weights[2].shape[0], weights[2].shape[1])   # (1, 64)
    # Sublane-pad the final weight so the output tile is a clean (8, 128k) slab.
    w2p = jnp.pad(w2, ((0, SUBLANE - c_out), (0, 0)))  # (8, 64), extra rows = 0

    vmem = pltpu.MemorySpace.VMEM

    if B <= lane_tile:
        # Small batch: pad lanes to a multiple of 128, single grid-free call
        # (no pipeline prologue / double-buffer bookkeeping for a 1-step grid).
        bpad = max(LANE, _round_up(B, LANE))
        xp = jnp.pad(x, ((0, 0), (0, bpad - B)))
        out = pl.pallas_call(
            _disc_z_kernel,
            out_shape=jax.ShapeDtypeStruct((SUBLANE, bpad), jnp.float32),
            in_specs=[pl.BlockSpec(memory_space=vmem)] * 4,
            out_specs=pl.BlockSpec(memory_space=vmem),
        )(xp, w0, w1, w2p)
    else:
        # Large batch: tile the lane (batch) axis; "parallel" lets megacore
        # shard tiles across the two TensorCores on v7x.  Per-step footprint:
        # x 32*1024*4 = 128 KiB, out 8*1024*4 = 32 KiB, weights ~26 KiB.
        bpad = _round_up(B, lane_tile)
        xp = jnp.pad(x, ((0, 0), (0, bpad - B)))
        grid = (bpad // lane_tile,)
        out = pl.pallas_call(
            _disc_z_kernel,
            out_shape=jax.ShapeDtypeStruct((SUBLANE, bpad), jnp.float32),
            grid=grid,
            in_specs=[
                pl.BlockSpec((c_in, lane_tile), lambda i: (0, i)),
                pl.BlockSpec(w0.shape, lambda i: (0, 0)),
                pl.BlockSpec(w1.shape, lambda i: (0, 0)),
                pl.BlockSpec(w2p.shape, lambda i: (0, 0)),
            ],
            out_specs=pl.BlockSpec((SUBLANE, lane_tile), lambda i: (0, i)),
            compiler_params=pltpu.CompilerParams(
                dimension_semantics=("parallel",)),
        )(xp, w0, w1, w2p)

    # Slice away row / lane padding, back to NCHW: (B, DP[-1], 1, 1).
    return out[:c_out, :B].T.reshape(B, c_out, 1, 1)


# --------------------------- deterministic params -----------------------------
def init_weights(key):
    """PyTorch Conv2d default (kaiming-uniform-ish) init, deterministic via PRNGKey."""
    weights = []
    last = LS
    for i in range(len(KS)):
        k = KS[i]
        cout = DP[i]
        fan_in = last * k * k
        bound = 1.0 / np.sqrt(fan_in)
        key, sub = jax.random.split(key)
        w = jax.random.uniform(sub, (cout, last, k, k),
                               minval=-bound, maxval=bound, dtype=jnp.float32)
        weights.append(w)
        last = cout
    return weights


# ----------------------------- reference (pure JAX) ---------------------------
def reference_forward(x_nchw, weights):
    h = x_nchw.reshape(x_nchw.shape[0], x_nchw.shape[1])
    for i, w in enumerate(weights):
        w2d = w.reshape(w.shape[0], w.shape[1])
        h = h @ w2d.T
        if i != len(weights) - 1:
            h = jnp.where(h > 0, h, LEAK * h)
    return h.reshape(h.shape[0], h.shape[1], 1, 1)


if __name__ == "__main__":
    key = jax.random.PRNGKey(0)
    key, xkey, xkey_big = jax.random.split(key, 3)
    weights = init_weights(key)

    # Latent code input: (B, LS, 1, 1) — what the ALI z-discriminator consumes.
    x = jax.random.normal(xkey, (BATCH, LS, 1, 1), dtype=jnp.float32)
    out = jax.block_until_ready(discriminator_z_forward(x, weights))
    ref = reference_forward(x, weights)
    np.testing.assert_allclose(np.asarray(out), np.asarray(ref),
                               rtol=1e-5, atol=1e-5)
    assert out.shape == (BATCH, DP[-1], 1, 1)

    # Amortized / lane-tiled path (exercises the "parallel" batch grid axis).
    B_big = 4096
    x_big = jax.random.normal(xkey_big, (B_big, LS, 1, 1), dtype=jnp.float32)
    out_big = jax.block_until_ready(discriminator_z_forward(x_big, weights))
    ref_big = reference_forward(x_big, weights)
    np.testing.assert_allclose(np.asarray(out_big), np.asarray(ref_big),
                               rtol=1e-5, atol=1e-5)
    assert out_big.shape == (B_big, DP[-1], 1, 1)

    print("KERNEL_OK")
</pallas_src>

<mosaic_0001>
module attributes {stable_mosaic.version = 11 : i64} {
  func.func @_disc_z_kernel(%arg0: memref<32x128xf32, #tpu.memory_space<vmem>>, %arg1: memref<64x32xf32, #tpu.memory_space<vmem>>, %arg2: memref<64x64xf32, #tpu.memory_space<vmem>>, %arg3: memref<8x64xf32, #tpu.memory_space<vmem>>, %arg4: memref<8x128xf32, #tpu.memory_space<vmem>>) attributes {dimension_semantics = [], scalar_prefetch = 0 : i64, scratch_operands = 0 : i64, tpu.core_type = #tpu.core_type<tc>} {
    %c0 = arith.constant 0 : index
    %c0_0 = arith.constant 0 : index
    %0 = vector.load %arg0[%c0, %c0_0] : memref<32x128xf32, #tpu.memory_space<vmem>>, vector<32x128xf32>
    %c0_1 = arith.constant 0 : index
    %c0_2 = arith.constant 0 : index
    %1 = vector.load %arg1[%c0_1, %c0_2] : memref<64x32xf32, #tpu.memory_space<vmem>>, vector<64x32xf32>
    %cst = arith.constant dense<0.000000e+00> : vector<64x128xf32>
    %2 = tpu.matmul %1, %0, %cst {dimension_numbers = #tpu.dot_dimension_numbers<[1], [0], [0], [1], [0, 0, 1, 1], [], []>} : vector<64x32xf32>, vector<32x128xf32>, vector<64x128xf32> -> vector<64x128xf32>
    %cst_3 = arith.constant 1.000000e-01 : f32
    %3 = vector.broadcast %cst_3 : f32 to vector<64x128xf32>
    %4 = arith.mulf %3, %2 : vector<64x128xf32>
    %5 = arith.maximumf %2, %4 : vector<64x128xf32>
    %c0_4 = arith.constant 0 : index
    %c0_5 = arith.constant 0 : index
    %6 = vector.load %arg2[%c0_4, %c0_5] : memref<64x64xf32, #tpu.memory_space<vmem>>, vector<64x64xf32>
    %cst_6 = arith.constant dense<0.000000e+00> : vector<64x128xf32>
    %7 = tpu.matmul %6, %5, %cst_6 {dimension_numbers = #tpu.dot_dimension_numbers<[1], [0], [0], [1], [0, 0, 1, 1], [], []>} : vector<64x64xf32>, vector<64x128xf32>, vector<64x128xf32> -> vector<64x128xf32>
    %cst_7 = arith.constant 1.000000e-01 : f32
    %8 = vector.broadcast %cst_7 : f32 to vector<64x128xf32>
    %9 = arith.mulf %8, %7 : vector<64x128xf32>
    %10 = arith.maximumf %7, %9 : vector<64x128xf32>
    %c0_8 = arith.constant 0 : index
    %c0_9 = arith.constant 0 : index
    %11 = vector.load %arg3[%c0_8, %c0_9] : memref<8x64xf32, #tpu.memory_space<vmem>>, vector<8x64xf32>
    %cst_10 = arith.constant dense<0.000000e+00> : vector<8x128xf32>
    %12 = tpu.matmul %11, %10, %cst_10 {dimension_numbers = #tpu.dot_dimension_numbers<[1], [0], [0], [1], [0, 0, 1, 1], [], []>} : vector<8x64xf32>, vector<64x128xf32>, vector<8x128xf32> -> vector<8x128xf32>
    %c0_11 = arith.constant 0 : index
    %c0_12 = arith.constant 0 : index
    %13 = vector.load %arg4[%c0_11, %c0_12] : memref<8x128xf32, #tpu.memory_space<vmem>>, vector<8x128xf32>
    tpu.vector_store %arg4[%c0_11, %c0_12], %12 {strides = array<i32>} : memref<8x128xf32, #tpu.memory_space<vmem>>, vector<8x128xf32>,
    return
  }
}

</mosaic_0001>

<llo_original>
// kernel: tpu_custom_call.1
$region0: #{tpu_custom_call.1}
  #allocation0 [shape = 'u32[]', space=smem, size = 0x4, offset = 0x4, fixed_abs, tag = 'smem constant byte address 0x4 - core index']
  #allocation1 [shape = 'u32[144,128]{1,0:T(1,128)}', space=vmem, size = 0x12000, scoped, tag = 'internal scratch']
  %s0 = inlined_call_operand.vmem [shape: f32[32,128], index: 0, kind: input, shape index: {}]
  %s1 = inlined_call_operand.vmem [shape: f32[64,32], index: 1, kind: input, shape index: {}]
  %s2 = inlined_call_operand.vmem [shape: f32[64,64], index: 2, kind: input, shape index: {}]
  %s3 = inlined_call_operand.vmem [shape: f32[8,64], index: 3, kind: input, shape index: {}]
  %s4 = inlined_call_operand.hbm [shape: f32[8,128], index: 4, kind: output, shape index: {}]
  %s5 = sld [smem:[#allocation0]]
  $region26: #{tpu_custom_call.1} parent=0
    _
  %s7 = ssub.s32 1, %s5
  %s8 = scalar_select 0, %s7, %s5
  $region1: #{tpu_custom_call.1} parent=0
    #allocation2 [shape = 'u8[4096]{0}', space=vmem, size = 0x1000, scoped, tag = 'output window, operand 0, single buffered']
    #allocation3 [shape = 's32[1]{0}', space=sflag, size = 0x4, scoped, tag = 'scoped memory for tpu_custom_call.1']
    %9 = vsyncpa [#allocation3], 0
    // Predicated region
    $region2: #{tpu_custom_call.1} parent=1 // pred_check
      _
    $region3: #{tpu_custom_call.1} parent=1 // pred_check_branch
      %11 = sbr.rel (0) target = $region5
    $region4: #{tpu_custom_call.1} parent=1 // pred_region
      _
    $region5: #{tpu_custom_call.1} parent=1 // pred_fallthru
      _
    // Predicated region
    $region6: #{tpu_custom_call.1} parent=1 // pred_check
      _
    $region7: #{tpu_custom_call.1} parent=1 // pred_check_branch
      %13 = sbr.rel (0) target = $region9
    $region8: #{tpu_custom_call.1} parent=1 // pred_region
      _
    $region9: #{tpu_custom_call.1} parent=1 // pred_fallthru
      _
    // Predicated region
    $region10: #{tpu_custom_call.1} parent=1 // pred_check
      _
    $region11: #{tpu_custom_call.1} parent=1 // pred_check_branch
      %15 = sbr.rel (0) target = $region13
    $region12: #{tpu_custom_call.1} parent=1 // pred_region
      _
    $region13: #{tpu_custom_call.1} parent=1 // pred_fallthru
      _
    // Predicated region
    $region14: #{tpu_custom_call.1} parent=1 // pred_check
      _
    $region15: #{tpu_custom_call.1} parent=1 // pred_check_branch
      %17 = sbr.rel (0) target = $region17
    $region16: #{tpu_custom_call.1} parent=1 // pred_region
      _
    $region17: #{tpu_custom_call.1} parent=1 // pred_fallthru
      _
    %v18 = vld [vmem:[%s0] sm:$0xff]
    %v19 = vld [vmem:[%s0 + $0x8] sm:$0xff]
    %v20 = vld [vmem:[%s0 + $0x10] sm:$0xff]
    %v21 = vld [vmem:[%s0 + $0x18] sm:$0xff]
    %v22 = vld [vmem:[%s1] sm:$0xff]
    %v23 = vld [vmem:[%s1 + $0x8] sm:$0xff]
    %v24 = vld [vmem:[%s1 + $0x10] sm:$0xff]
    %v25 = vld [vmem:[%s1 + $0x18] sm:$0xff]
    %v26 = vld [vmem:[%s1 + $0x20] sm:$0xff]
    %v27 = vld [vmem:[%s1 + $0x28] sm:$0xff]
    %v28 = vld [vmem:[%s1 + $0x30] sm:$0xff]
    %v29 = vld [vmem:[%s1 + $0x38] sm:$0xff]
    %vm30 = vcmask 261120
    %v32 = vsel %vm30, %v22, 0
    %v35 = vsel %vm30, %v23, 0
    %v38 = vsel %vm30, %v24, 0
    %v41 = vsel %vm30, %v25, 0
    %v44 = vsel %vm30, %v26, 0
    %v47 = vsel %vm30, %v27, 0
    %v50 = vsel %vm30, %v28, 0
    %v53 = vsel %vm30, %v29, 0
    %55 = vmatprep.subr.mxu0 0.0
    %56 = vmatpush1.msra.mxu0 %v18
    %57 = vmatprep.subr.mxu0 0.0
    %58 = vmatpush1.msra.mxu0 %v19
    %59 = vmatprep.subr.mxu0 0.0
    %60 = vmatpush1.msra.mxu0 %v20
    %61 = vmatprep.subr.mxu0 0.0
    %62 = vmatpush1.msra.mxu0 %v21
    %63 = vmatprep.subr.mxu0 0.0
    %64 = vmatpush1.msra.mxu0 0.0
    %65 = vmatprep.subr.mxu0 0.0
    %66 = vmatpush1.msra.mxu0 0.0
    %67 = vmatprep.subr.mxu0 0.0
    %68 = vmatpush1.msra.mxu0 0.0
    %69 = vmatprep.subr.mxu0 0.0
    %70 = vmatpush1.msra.mxu0 0.0
    %71 = vmatprep.subr.mxu0 0.0
    %72 = vmatpush1.msra.mxu0 0.0
    %73 = vmatprep.subr.mxu0 0.0
    %74 = vmatpush1.msra.mxu0 0.0
    %75 = vmatprep.subr.mxu0 0.0
    %76 = vmatpush1.msra.mxu0 0.0
    %77 = vmatprep.subr.mxu0 0.0
    %78 = vmatpush1.msra.mxu0 0.0
    %79 = vmatprep.subr.mxu0 0.0
    %80 = vmatpush1.msra.mxu0 0.0
    %81 = vmatprep.subr.mxu0 0.0
    %82 = vmatpush1.msra.mxu0 0.0
    %83 = vmatprep.subr.mxu0 0.0
    %84 = vmatpush1.msra.mxu0 0.0
    %85 = vmatprep.subr.mxu0 0.0
    %86 = vmatpush1.msra.mxu0 0.0
    %87 = vmatprep.subr.mxu0 0.0
    %88 = vmatpush1.msra.mxu0 0.0
    %89 = vmatprep.subr.mxu0 0.0
    %90 = vmatpush1.msra.mxu0 0.0
    %91 = vmatprep.subr.mxu0 0.0
    %92 = vmatpush1.msra.mxu0 0.0
    %93 = vmatprep.subr.mxu0 0.0
    %94 = vmatpush1.msra.mxu0 0.0
    %95 = vmatprep.subr.mxu0 0.0
    %96 = vmatpush1.msra.mxu0 0.0
    %97 = vmatprep.subr.mxu0 0.0
    %98 = vmatpush1.msra.mxu0 0.0
    %99 = vmatprep.subr.mxu0 0.0
    %100 = vmatpush1.msra.mxu0 0.0
    %101 = vmatprep.subr.mxu0 0.0
    %102 = vmatpush1.msra.mxu0 0.0
    %103 = vmatprep.subr.mxu0 0.0
    %104 = vmatpush1.msra.mxu0 0.0
    %105 = vmatprep.subr.mxu0 0.0
    %106 = vmatpush1.msra.mxu0 0.0
    %107 = vmatprep.subr.mxu0 0.0
    %108 = vmatpush1.msra.mxu0 0.0
    %109 = vmatprep.subr.mxu0 0.0
    %110 = vmatpush1.msra.mxu0 0.0
    %111 = vmatprep.subr.mxu0 0.0
    %112 = vmatpush1.msra.mxu0 0.0
    %113 = vmatprep.subr.mxu0 0.0
    %114 = vmatpush1.msra.mxu0 0.0
    %115 = vmatprep.subr.mxu0 0.0
    %116 = vmatpush1.msra.mxu0 0.0
    %117 = vmatprep.subr.mxu0 0.0
    %118 = vmatpush1.msra.mxu0 0.0
    %119 = vmatprep.mubr.f32.mxu0 0.0
    %120 = vmatmul.mubr.f32.gmra.mrb[0].mxu0 %v32
    %v121 = vpop.f32.mrb[0].mxu0
    %v122 = vadd.f32 0.0, %v121
    %v123 = vpop.f32.mrb[0].mxu0
    %124 = vmatprep.mubr.f32.mxu0 0.0
    %125 = vmatmul.mubr.f32.gmra.mrb[0].mxu0 %v35
    %v126 = vpop.f32.mrb[0].mxu0
    %v127 = vadd.f32 0.0, %v126
    %v128 = vpop.f32.mrb[0].mxu0
    %129 = vmatprep.mubr.f32.mxu0 0.0
    %130 = vmatmul.mubr.f32.gmra.mrb[0].mxu0 %v38
    %v131 = vpop.f32.mrb[0].mxu0
    %v132 = vadd.f32 0.0, %v131
    %v133 = vpop.f32.mrb[0].mxu0
    %134 = vmatprep.mubr.f32.mxu0 0.0
    %135 = vmatmul.mubr.f32.gmra.mrb[0].mxu0 %v41
    %v136 = vpop.f32.mrb[0].mxu0
    %v137 = vadd.f32 0.0, %v136
    %v138 = vpop.f32.mrb[0].mxu0
    %139 = vmatprep.mubr.f32.mxu0 0.0
    %140 = vmatmul.mubr.f32.gmra.mrb[0].mxu0 %v44
    %v141 = vpop.f32.mrb[0].mxu0
    %v142 = vadd.f32 0.0, %v141
    %v143 = vpop.f32.mrb[0].mxu0
    %144 = vmatprep.mubr.f32.mxu0 0.0
    %145 = vmatmul.mubr.f32.gmra.mrb[0].mxu0 %v47
    %v146 = vpop.f32.mrb[0].mxu0
    %v147 = vadd.f32 0.0, %v146
    %v148 = vpop.f32.mrb[0].mxu0
    %149 = vmatprep.mubr.f32.mxu0 0.0
    %150 = vmatmul.mubr.f32.gmra.mrb[0].mxu0 %v50
    %v151 = vpop.f32.mrb[0].mxu0
    %v152 = vadd.f32 0.0, %v151
    %v153 = vpop.f32.mrb[0].mxu0
    %154 = vmatprep.mubr.f32.mxu0 0.0
    %155 = vmatmul.mubr.f32.gmra.mrb[0].mxu0 %v53
    %v156 = vpop.f32.mrb[0].mxu0
    %v157 = vadd.f32 0.0, %v156
    %v158 = vpop.f32.mrb[0].mxu0
    %159 = vdwg.mxu0
    %v160 = vmul.f32 %v122, 0.1
    %v161 = vmul.f32 %v127, 0.1
    %v162 = vmul.f32 %v132, 0.1
    %v163 = vmul.f32 %v137, 0.1
    %v164 = vmul.f32 %v142, 0.1
    %v165 = vmul.f32 %v147, 0.1
    %v166 = vmul.f32 %v152, 0.1
    %v167 = vmul.f32 %v157, 0.1
    %v168 = vmax.f32 %v122, %v160
    %v169 = vmax.f32 %v127, %v161
    %v170 = vmax.f32 %v132, %v162
    %v171 = vmax.f32 %v137, %v163
    %v172 = vmax.f32 %v142, %v164
    %v173 = vmax.f32 %v147, %v165
    %v174 = vmax.f32 %v152, %v166
    %v175 = vmax.f32 %v157, %v167
    %v176 = vld [vmem:[%s2] sm:$0xff]
    %v177 = vld [vmem:[%s2 + $0x8] sm:$0xff]
    %v178 = vld [vmem:[%s2 + $0x10] sm:$0xff]
    %v179 = vld [vmem:[%s2 + $0x18] sm:$0xff]
    %v180 = vld [vmem:[%s2 + $0x20] sm:$0xff]
    %v181 = vld [vmem:[%s2 + $0x28] sm:$0xff]
    %v182 = vld [vmem:[%s2 + $0x30] sm:$0xff]
    %v183 = vld [vmem:[%s2 + $0x38] sm:$0xff]
    %vm184 = vcmask 523264
    %v186 = vsel %vm184, %v176, 0
    %v189 = vsel %vm184, %v177, 0
    %v192 = vsel %vm184, %v178, 0
    %v195 = vsel %vm184, %v179, 0
    %v198 = vsel %vm184, %v180, 0
    %v201 = vsel %vm184, %v181, 0
    %v204 = vsel %vm184, %v182, 0
    %v207 = vsel %vm184, %v183, 0
    %209 = vmatprep.subr.mxu0 0.0
    %210 = vmatpush1.msra.mxu0 %v168
    %211 = vmatprep.subr.mxu0 0.0
    %212 = vmatpush1.msra.mxu0 %v169
    %213 = vmatprep.subr.mxu0 0.0
    %214 = vmatpush1.msra.mxu0 %v170
    %215 = vmatprep.subr.mxu0 0.0
    %216 = vmatpush1.msra.mxu0 %v171
    %217 = vmatprep.subr.mxu0 0.0
    %218 = vmatpush1.msra.mxu0 %v172
    %219 = vmatprep.subr.mxu0 0.0
    %220 = vmatpush1.msra.mxu0 %v173
    %221 = vmatprep.subr.mxu0 0.0
    %222 = vmatpush1.msra.mxu0 %v174
    %223 = vmatprep.subr.mxu0 0.0
    %224 = vmatpush1.msra.mxu0 %v175
    %225 = vmatprep.subr.mxu0 0.0
    %226 = vmatpush1.msra.mxu0 0.0
    %227 = vmatprep.subr.mxu0 0.0
    %228 = vmatpush1.msra.mxu0 0.0
    %229 = vmatprep.subr.mxu0 0.0
    %230 = vmatpush1.msra.mxu0 0.0
    %231 = vmatprep.subr.mxu0 0.0
    %232 = vmatpush1.msra.mxu0 0.0
    %233 = vmatprep.subr.mxu0 0.0
    %234 = vmatpush1.msra.mxu0 0.0
    %235 = vmatprep.subr.mxu0 0.0
    %236 = vmatpush1.msra.mxu0 0.0
    %237 = vmatprep.subr.mxu0 0.0
    %238 = vmatpush1.msra.mxu0 0.0
    %239 = vmatprep.subr.mxu0 0.0
    %240 = vmatpush1.msra.mxu0 0.0
    %241 = vmatprep.subr.mxu0 0.0
    %242 = vmatpush1.msra.mxu0 0.0
    %243 = vmatprep.subr.mxu0 0.0
    %244 = vmatpush1.msra.mxu0 0.0
    %245 = vmatprep.subr.mxu0 0.0
    %246 = vmatpush1.msra.mxu0 0.0
    %247 = vmatprep.subr.mxu0 0.0
    %248 = vmatpush1.msra.mxu0 0.0
    %249 = vmatprep.subr.mxu0 0.0
    %250 = vmatpush1.msra.mxu0 0.0
    %251 = vmatprep.subr.mxu0 0.0
    %252 = vmatpush1.msra.mxu0 0.0
    %253 = vmatprep.subr.mxu0 0.0
    %254 = vmatpush1.msra.mxu0 0.0
    %255 = vmatprep.subr.mxu0 0.0
    %256 = vmatpush1.msra.mxu0 0.0
    %257 = vmatprep.subr.mxu0 0.0
    %258 = vmatpush1.msra.mxu0 0.0
    %259 = vmatprep.subr.mxu0 0.0
    %260 = vmatpush1.msra.mxu0 0.0
    %261 = vmatprep.subr.mxu0 0.0
    %262 = vmatpush1.msra.mxu0 0.0
    %263 = vmatprep.subr.mxu0 0.0
    %264 = vmatpush1.msra.mxu0 0.0
    %265 = vmatprep.subr.mxu0 0.0
    %266 = vmatpush1.msra.mxu0 0.0
    %267 = vmatprep.subr.mxu0 0.0
    %268 = vmatpush1.msra.mxu0 0.0
    %269 = vmatprep.subr.mxu0 0.0
    %270 = vmatpush1.msra.mxu0 0.0
    %271 = vmatprep.subr.mxu0 0.0
    %272 = vmatpush1.msra.mxu0 0.0
    %273 = vmatprep.mubr.f32.mxu0 0.0
    %274 = vmatmul.mubr.f32.gmra.mrb[0].mxu0 %v186
    %v275 = vpop.f32.mrb[0].mxu0
    %v276 = vadd.f32 0.0, %v275
    %v277 = vpop.f32.mrb[0].mxu0
    %278 = vmatprep.mubr.f32.mxu0 0.0
    %279 = vmatmul.mubr.f32.gmra.mrb[0].mxu0 %v189
    %v280 = vpop.f32.mrb[0].mxu0
    %v281 = vadd.f32 0.0, %v280
    %v282 = vpop.f32.mrb[0].mxu0
    %283 = vmatprep.mubr.f32.mxu0 0.0
    %284 = vmatmul.mubr.f32.gmra.mrb[0].mxu0 %v192
    %v285 = vpop.f32.mrb[0].mxu0
    %v286 = vadd.f32 0.0, %v285
    %v287 = vpop.f32.mrb[0].mxu0
    %288 = vmatprep.mubr.f32.mxu0 0.0
    %289 = vmatmul.mubr.f32.gmra.mrb[0].mxu0 %v195
    %v290 = vpop.f32.mrb[0].mxu0
    %v291 = vadd.f32 0.0, %v290
    %v292 = vpop.f32.mrb[0].mxu0
    %293 = vmatprep.mubr.f32.mxu0 0.0
    %294 = vmatmul.mubr.f32.gmra.mrb[0].mxu0 %v198
    %v295 = vpop.f32.mrb[0].mxu0
    %v296 = vadd.f32 0.0, %v295
    %v297 = vpop.f32.mrb[0].mxu0
    %298 = vmatprep.mubr.f32.mxu0 0.0
    %299 = vmatmul.mubr.f32.gmra.mrb[0].mxu0 %v201
    %v300 = vpop.f32.mrb[0].mxu0
    %v301 = vadd.f32 0.0, %v300
    %v302 = vpop.f32.mrb[0].mxu0
    %303 = vmatprep.mubr.f32.mxu0 0.0
    %304 = vmatmul.mubr.f32.gmra.mrb[0].mxu0 %v204
    %v305 = vpop.f32.mrb[0].mxu0
    %v306 = vadd.f32 0.0, %v305
    %v307 = vpop.f32.mrb[0].mxu0
    %308 = vmatprep.mubr.f32.mxu0 0.0
    %309 = vmatmul.mubr.f32.gmra.mrb[0].mxu0 %v207
    %v310 = vpop.f32.mrb[0].mxu0
    %v311 = vadd.f32 0.0, %v310
    %v312 = vpop.f32.mrb[0].mxu0
    %313 = vdwg.mxu0
    %v314 = vmul.f32 %v276, 0.1
    %v315 = vmul.f32 %v281, 0.1
    %v316 = vmul.f32 %v286, 0.1
    %v317 = vmul.f32 %v291, 0.1
    %v318 = vmul.f32 %v296, 0.1
    %v319 = vmul.f32 %v301, 0.1
    %v320 = vmul.f32 %v306, 0.1
    %v321 = vmul.f32 %v311, 0.1
    %v322 = vmax.f32 %v276, %v314
    %v323 = vmax.f32 %v281, %v315
    %v324 = vmax.f32 %v286, %v316
    %v325 = vmax.f32 %v291, %v317
    %v326 = vmax.f32 %v296, %v318
    %v327 = vmax.f32 %v301, %v319
    %v328 = vmax.f32 %v306, %v320
    %v329 = vmax.f32 %v311, %v321
    %v330 = vld [vmem:[%s3] sm:$0xff]
    %v332 = vsel %vm184, %v330, 0
    %334 = vmatprep.subr.mxu0 0.0
    %335 = vmatpush1.msra.mxu0 %v322
    %336 = vmatprep.subr.mxu0 0.0
    %337 = vmatpush1.msra.mxu0 %v323
    %338 = vmatprep.subr.mxu0 0.0
    %339 = vmatpush1.msra.mxu0 %v324
    %340 = vmatprep.subr.mxu0 0.0
    %341 = vmatpush1.msra.mxu0 %v325
    %342 = vmatprep.subr.mxu0 0.0
    %343 = vmatpush1.msra.mxu0 %v326
    %344 = vmatprep.subr.mxu0 0.0
    %345 = vmatpush1.msra.mxu0 %v327
    %346 = vmatprep.subr.mxu0 0.0
    %347 = vmatpush1.msra.mxu0 %v328
    %348 = vmatprep.subr.mxu0 0.0
    %349 = vmatpush1.msra.mxu0 %v329
    %350 = vmatprep.subr.mxu0 0.0
    %351 = vmatpush1.msra.mxu0 0.0
    %352 = vmatprep.subr.mxu0 0.0
    %353 = vmatpush1.msra.mxu0 0.0
    %354 = vmatprep.subr.mxu0 0.0
    %355 = vmatpush1.msra.mxu0 0.0
    %356 = vmatprep.subr.mxu0 0.0
    %357 = vmatpush1.msra.mxu0 0.0
    %358 = vmatprep.subr.mxu0 0.0
    %359 = vmatpush1.msra.mxu0 0.0
    %360 = vmatprep.subr.mxu0 0.0
    %361 = vmatpush1.msra.mxu0 0.0
    %362 = vmatprep.subr.mxu0 0.0
    %363 = vmatpush1.msra.mxu0 0.0
    %364 = vmatprep.subr.mxu0 0.0
    %365 = vmatpush1.msra.mxu0 0.0
    %366 = vmatprep.subr.mxu0 0.0
    %367 = vmatpush1.msra.mxu0 0.0
    %368 = vmatprep.subr.mxu0 0.0
    %369 = vmatpush1.msra.mxu0 0.0
    %370 = vmatprep.subr.mxu0 0.0
    %371 = vmatpush1.msra.mxu0 0.0
    %372 = vmatprep.subr.mxu0 0.0
    %373 = vmatpush1.msra.mxu0 0.0
    %374 = vmatprep.subr.mxu0 0.0
    %375 = vmatpush1.msra.mxu0 0.0
    %376 = vmatprep.subr.mxu0 0.0
    %377 = vmatpush1.msra.mxu0 0.0
    %378 = vmatprep.subr.mxu0 0.0
    %379 = vmatpush1.msra.mxu0 0.0
    %380 = vmatprep.subr.mxu0 0.0
    %381 = vmatpush1.msra.mxu0 0.0
    %382 = vmatprep.subr.mxu0 0.0
    %383 = vmatpush1.msra.mxu0 0.0
    %384 = vmatprep.subr.mxu0 0.0
    %385 = vmatpush1.msra.mxu0 0.0
    %386 = vmatprep.subr.mxu0 0.0
    %387 = vmatpush1.msra.mxu0 0.0
    %388 = vmatprep.subr.mxu0 0.0
    %389 = vmatpush1.msra.mxu0 0.0
    %390 = vmatprep.subr.mxu0 0.0
    %391 = vmatpush1.msra.mxu0 0.0
    %392 = vmatprep.subr.mxu0 0.0
    %393 = vmatpush1.msra.mxu0 0.0
    %394 = vmatprep.subr.mxu0 0.0
    %395 = vmatpush1.msra.mxu0 0.0
    %396 = vmatprep.subr.mxu0 0.0
    %397 = vmatpush1.msra.mxu0 0.0
    %398 = vmatprep.mubr.f32.mxu0 0.0
    %399 = vmatmul.mubr.f32.gmra.mrb[0].mxu0 %v332
    %v400 = vpop.f32.mrb[0].mxu0
    %v401 = vadd.f32 0.0, %v400
    %v402 = vpop.f32.mrb[0].mxu0
    %403 = vdwg.mxu0
    %404 = vst [vmem:[#allocation2] sm:$0xff] %v401
    // Predicated region
    $region18: #{tpu_custom_call.1} parent=1 // pred_check
      _
    $region19: #{tpu_custom_call.1} parent=1 // pred_check_branch
      %406 = sbr.rel (0) target = $region21
    $region20: #{tpu_custom_call.1} parent=1 // pred_region
      %s408 = ssub.s32 128, 128
      %409 = vsyncadd [#allocation3], %s408
      %s411 = sshll.u32 [#allocation2], 4
      %s412 = int_to_ptr.vmem [resolvable:$true] %s411
      %414 = dma.vmem_to_hbm [thread:$0]  %s412, 128, %s4, [#allocation3]
    $region21: #{tpu_custom_call.1} parent=1 // pred_fallthru
      _
    // Predicated region
    $region22: #{tpu_custom_call.1} parent=1 // pred_check
      _
    $region23: #{tpu_custom_call.1} parent=1 // pred_check_branch
      %416 = sbr.rel (0) target = $region25
    $region24: #{tpu_custom_call.1} parent=1 // pred_region
      %417 = dma.done [#allocation3], 128
    $region25: #{tpu_custom_call.1} parent=1 // pred_fallthru
      _
    %418 = vsyncpa [#allocation3], 1

</llo_original>
